<compile_context>
chip_gen: v6e
topology: v6e:2x2x1
jax: 0.10.0
libtpu: 0.0.40
codegen_flags: <defaults>
</compile_context>

<pallas_src>
import jax
import jax.numpy as jnp
from jax.experimental import pallas as pl
from jax.experimental.pallas import tpu as pltpu


def _residual_block_kernel(x_ref, w_ref, b_ref, o_ref):
    # x_ref : (1, 9*C, TILE_P)  im2col'd input pixels (pixels in the lane dim)
    # w_ref : (Co, 9*C)         3x3 weights with the 1x1 shortcut folded in
    # b_ref : (Co, 1)           folded bias
    # o_ref : (1, Co, TILE_P)   lane-dense output (pixels in the lane dim)
    acc = jnp.dot(w_ref[...], x_ref[0],
                  preferred_element_type=jnp.float32)        # (Co, TILE_P)
    o_ref[...] = (acc + b_ref[...])[None].astype(o_ref.dtype)


def _pick_pixel_tile(hw):
    # Largest lane-aligned tile (multiple of 128) that divides H*W; fall back
    # to the whole image for tiny / odd sizes.
    for cand in (2048, 1024, 512, 256, 128):
        if hw % cand == 0:
            return cand
    return hw


def residual_block_forward(x_nchw, w3=None, b3=None, w1=None, b1=None,
                           compute_dtype=None):
    """res = Conv2d3x3(x) + Conv2d1x1(x), PyTorch NCHW in / NCHW out.

    w3: (Co, C, 3, 3), b3: (Co,), w1: (Co, C, 1, 1), b1: (Co,)  (PyTorch layout)
    Passing w3=None reproduces the `conv is None` identity branch; passing
    w1=None reproduces the `shortcut is None` single-conv branch.
    """
    if w3 is None:                              # ResidualBlock(None, ...)
        return x_nchw

    B, C, H, W = x_nchw.shape
    Co = w3.shape[0]
    HW = H * W

    # Fold the 1x1 shortcut into the center tap of the 3x3 weights so the
    # whole block is a single convolution: conv3x3(x) + conv1x1(x).
    w = w3
    b = b3
    if w1 is not None:
        w = w.at[:, :, 1, 1].add(w1[:, :, 0, 0])
        b = b + b1

    # im2col directly in NCHW (no layout transposes): (B, 9*C, H*W) with the
    # tap index major and channel minor. This is a 9x expansion of a tensor
    # that is tiny at small C; for large C one would tile taps in-kernel.
    x_pad = jnp.pad(x_nchw, ((0, 0), (0, 0), (1, 1), (1, 1)))
    taps = [x_pad[:, :, dy:dy + H, dx:dx + W]
            for dy in range(3) for dx in range(3)]            # 9 x (B,C,H,W)
    x_cols = jnp.stack(taps, axis=1).reshape(B, 9 * C, HW)

    # (Co, C, 3, 3) -> (Co, 3, 3, C) -> (Co, 9*C): matches tap-major packing.
    w_mat = jnp.transpose(w, (0, 2, 3, 1)).reshape(Co, 9 * C)
    b_col = b.reshape(Co, 1)

    if compute_dtype is not None:   # e.g. jnp.bfloat16 on v6e/v7x for MXU rate
        x_cols = x_cols.astype(compute_dtype)
        w_mat = w_mat.astype(compute_dtype)

    tile_p = _pick_pixel_tile(HW)
    grid = (B, HW // tile_p)

    out = pl.pallas_call(
        _residual_block_kernel,
        out_shape=jax.ShapeDtypeStruct((B, Co, HW), x_nchw.dtype),
        grid_spec=pltpu.PrefetchScalarGridSpec(
            num_scalar_prefetch=0,
            grid=grid,
            in_specs=[
                pl.BlockSpec((1, 9 * C, tile_p), lambda bi, p: (bi, 0, p)),
                pl.BlockSpec((Co, 9 * C), lambda bi, p: (0, 0)),
                pl.BlockSpec((Co, 1), lambda bi, p: (0, 0)),
            ],
            out_specs=pl.BlockSpec((1, Co, tile_p), lambda bi, p: (bi, 0, p)),
        ),
        compiler_params=pltpu.CompilerParams(
            dimension_semantics=("parallel", "parallel")),
    )(x_cols, w_mat, b_col)

    # (B, Co, H*W) is already NCHW modulo a free reshape.
    return out.reshape(B, Co, H, W)


def _reference(x_nchw, w3, b3, w1, b1):
    # Pure-JAX reference (lax conv, NCHW) for correctness check.
    dn = jax.lax.conv_dimension_numbers(x_nchw.shape, w3.shape,
                                        ("NCHW", "OIHW", "NCHW"))
    conv = jax.lax.conv_general_dilated(
        x_nchw, w3, window_strides=(1, 1), padding="SAME",
        dimension_numbers=dn) + b3.reshape(1, -1, 1, 1)
    short = jax.lax.conv_general_dilated(
        x_nchw, w1, window_strides=(1, 1), padding="VALID",
        dimension_numbers=dn) + b1.reshape(1, -1, 1, 1)
    return conv + short


if __name__ == "__main__":
    key = jax.random.PRNGKey(0)
    k_x, k_w3, k_b3, k_w1, k_b1 = jax.random.split(key, 5)

    B, C, H, W = 2, 4, 16, 16
    Co = 8

    x = jax.random.normal(k_x, (B, C, H, W), dtype=jnp.float32)
    w3 = jax.random.normal(k_w3, (Co, C, 3, 3), dtype=jnp.float32) * 0.1
    b3 = jax.random.normal(k_b3, (Co,), dtype=jnp.float32) * 0.1
    w1 = jax.random.normal(k_w1, (Co, C, 1, 1), dtype=jnp.float32) * 0.1
    b1 = jax.random.normal(k_b1, (Co,), dtype=jnp.float32) * 0.1

    out = residual_block_forward(x, w3, b3, w1, b1)
    out = jax.block_until_ready(out)

    ref = jax.block_until_ready(_reference(x, w3, b3, w1, b1))
    assert out.shape == (B, Co, H, W)
    assert jnp.allclose(out, ref, atol=1e-4, rtol=1e-4)

    # `shortcut is None` branch: just the 3x3 conv.
    out_conv_only = jax.block_until_ready(
        residual_block_forward(x, w3, b3, None, None))
    dn = jax.lax.conv_dimension_numbers(x.shape, w3.shape,
                                        ("NCHW", "OIHW", "NCHW"))
    ref_conv_only = jax.lax.conv_general_dilated(
        x, w3, (1, 1), "SAME", dimension_numbers=dn) + b3.reshape(1, -1, 1, 1)
    assert jnp.allclose(out_conv_only, ref_conv_only, atol=1e-4, rtol=1e-4)

    # `conv is None` branch: identity.
    assert jnp.allclose(residual_block_forward(x), x)

    print("KERNEL_OK")
</pallas_src>

<mosaic_0001>
module attributes {stable_mosaic.version = 11 : i64} {
  func.func @_residual_block_kernel(%arg0: i32, %arg1: i32, %arg2: memref<1x36x256xf32, #tpu.memory_space<vmem>>, %arg3: memref<8x36xf32, #tpu.memory_space<vmem>>, %arg4: memref<8x1xf32, #tpu.memory_space<vmem>>, %arg5: memref<1x8x256xf32, #tpu.memory_space<vmem>>) attributes {dimension_semantics = [#tpu.dimension_semantics<parallel>, #tpu.dimension_semantics<parallel>], iteration_bounds = array<i64: 2, 1>, scalar_prefetch = 0 : i64, scratch_operands = 0 : i64, tpu.core_type = #tpu.core_type<tc>, window_params = [{transform_indices = @transform_0, window_bounds = array<i64: 1, 36, 256>}, {pipeline_mode = #tpu.pipeline_mode<synchronous>, transform_indices = @transform_1, window_bounds = array<i64: 8, 36>}, {pipeline_mode = #tpu.pipeline_mode<synchronous>, transform_indices = @transform_2, window_bounds = array<i64: 8, 1>}, {transform_indices = @transform_3, window_bounds = array<i64: 1, 8, 256>}]} {
    %c0 = arith.constant 0 : index
    %c0_0 = arith.constant 0 : index
    %0 = vector.load %arg3[%c0, %c0_0] : memref<8x36xf32, #tpu.memory_space<vmem>>, vector<8x36xf32>
    %c0_1 = arith.constant 0 : index
    %c0_2 = arith.constant 0 : index
    %c0_3 = arith.constant 0 : index
    %1 = vector.load %arg2[%c0_1, %c0_2, %c0_3] : memref<1x36x256xf32, #tpu.memory_space<vmem>>, vector<1x36x256xf32>
    %2 = vector.shape_cast %1 : vector<1x36x256xf32> to vector<36x256xf32>
    %cst = arith.constant dense<0.000000e+00> : vector<8x256xf32>
    %3 = tpu.matmul %0, %2, %cst {dimension_numbers = #tpu.dot_dimension_numbers<[1], [0], [0], [1], [0, 0, 1, 1], [], []>} : vector<8x36xf32>, vector<36x256xf32>, vector<8x256xf32> -> vector<8x256xf32>
    %c0_4 = arith.constant 0 : index
    %c0_5 = arith.constant 0 : index
    %4 = vector.load %arg4[%c0_4, %c0_5] : memref<8x1xf32, #tpu.memory_space<vmem>>, vector<8x1xf32>
    %5 = vector.broadcast %4 : vector<8x1xf32> to vector<8x256xf32>
    %6 = arith.addf %3, %5 : vector<8x256xf32>
    %7 = vector.shape_cast %6 : vector<8x256xf32> to vector<1x8x256xf32>
    %c0_6 = arith.constant 0 : index
    %c0_7 = arith.constant 0 : index
    %c0_8 = arith.constant 0 : index
    %8 = vector.load %arg5[%c0_6, %c0_7, %c0_8] : memref<1x8x256xf32, #tpu.memory_space<vmem>>, vector<1x8x256xf32>
    tpu.vector_store %arg5[%c0_6, %c0_7, %c0_8], %7 {strides = array<i32>} : memref<1x8x256xf32, #tpu.memory_space<vmem>>, vector<1x8x256xf32>,
    return
  }
  func.func @transform_0(%arg0: i32, %arg1: i32) -> (i32, i32, i32) {
    %c0_i32 = arith.constant 0 : i32
    %c0_i32_0 = arith.constant 0 : i32
    return %arg0, %c0_i32, %arg1 : i32, i32, i32
  }
  func.func @transform_1(%arg0: i32, %arg1: i32) -> (i32, i32) {
    %c0_i32 = arith.constant 0 : i32
    %c0_i32_0 = arith.constant 0 : i32
    %c0_i32_1 = arith.constant 0 : i32
    return %c0_i32, %c0_i32_0 : i32, i32
  }
  func.func @transform_2(%arg0: i32, %arg1: i32) -> (i32, i32) {
    %c0_i32 = arith.constant 0 : i32
    %c0_i32_0 = arith.constant 0 : i32
    %c0_i32_1 = arith.constant 0 : i32
    return %c0_i32, %c0_i32_0 : i32, i32
  }
  func.func @transform_3(%arg0: i32, %arg1: i32) -> (i32, i32, i32) {
    %c0_i32 = arith.constant 0 : i32
    %c0_i32_0 = arith.constant 0 : i32
    return %arg0, %c0_i32, %arg1 : i32, i32, i32
  }
}

</mosaic_0001>

<llo_original>
// kernel: tpu_custom_call.1
$region0: #{tpu_custom_call.1}
  #allocation0 [shape = 'u32[]', space=smem, size = 0x4, offset = 0x4, fixed_abs, tag = 'smem constant byte address 0x4 - core index']
  #allocation1 [shape = 'u32[144,128]{1,0:T(1,128)}', space=vmem, size = 0x12000, scoped, tag = 'internal scratch']
  %s0 = inlined_call_operand.vmem [shape: f32[2,36,256], index: 0, kind: input, shape index: {}]
  %s1 = inlined_call_operand.vmem [shape: f32[8,36], index: 1, kind: input, shape index: {}]
  %s2 = inlined_call_operand.vmem [shape: f32[8,1], index: 2, kind: input, shape index: {}]
  %s3 = inlined_call_operand.hbm [shape: f32[2,8,256], index: 3, kind: output, shape index: {}]
  %s4 = sld [smem:[#allocation0]]
  $region45: #{tpu_custom_call.1} parent=0
    _
  %s6 = ssub.s32 1, %s4
  %s7 = scalar_select 0, %s6, %s4
  $region1: #{tpu_custom_call.1} parent=0
    #allocation2 [shape = 'u8[16384]{0}', space=vmem, size = 0x4000, scoped, tag = 'output window, operand 0']
    #allocation3 [shape = 's32[2]{0}', space=sflag, size = 0x8, scoped, tag = 'scoped memory for tpu_custom_call.1']
    %8 = vsyncpa [#allocation3], 0
    %s9 = scalar_lea.sflag [#allocation3], 1
    %10 = vsyncpa %s9, 0
    loop: start=0, step=1, limit=4
    $region2: #{tpu_custom_call.1} parent=1 // loop_pre_header
      _
    $region3: #{tpu_custom_call.1} parent=1 // loop_header
      %s12 = sphi 0, %s16
      %p13 = scmp.ge.s32.totalorder %s12, 4
      %s19 = sphi 0, %s31
      %s20 = sphi 0, %s27
      %s21 = sphi 0, %s19
      %s22 = sphi 0, %s20
      %s23 = sphi 0, %s21
      %s24 = sphi 0, %s22
      %s36 = sphi 0, %s38
      %s39 = sphi 0, %s36
      %s40 = sphi 0, %s39
      %s56 = sphi 0, %s40
      %s60 = sphi 0, %s60
      %s62 = sphi 0, %s60
      %s63 = sphi 0, %s62
      %s77 = sphi 0, %s63
      %s81 = sphi 0, %s81
      %s83 = sphi 0, %s81
      %s84 = sphi 0, %s83
      %s98 = sphi 0, %s84
      %s106 = sphi 0, %s108
      %s109 = sphi 0, %s106
      %s110 = sphi 0, %s109
      %s126 = sphi 0, %s110
    $region4: #{tpu_custom_call.1} parent=1 // loop_header_branch
      %15 = sbr.rel (%p13) target = $region8
    $region5: #{tpu_custom_call.1} parent=1 // loop_body
      %s17 = ssub.s32 %s12, 1
      %s18 = ssub.s32 %s12, 2
      %s25 = sadd.s32 1, %s20
      %p26 = scmp.ge.s32.totalorder %s25, 1
      %s27 = scalar_select %p26, 0, %s25
      %s28 = sadd.s32 1, %s19
      %s29 = scalar_select %p26, %s28, %s19
      %p30 = scmp.ge.s32.totalorder %s29, 2
      %s31 = scalar_select %p30, 0, %s29
      %s32 = ssub.s32 %s19, %s31
      %s33 = ssub.s32 %s20, %s27
      %s34 = sor.u32 %s32, %s33
      %p35 = scmp.eq.s32.totalorder %s34, 0
      %s37 = sadd.s32 %s36, 1
      %s38 = scalar_select %p35, %s36, %s37
      %p41 = pneg %p35
      %p42 = scmp.eq.s32.totalorder %s12, 1
      %p43 = por %p41, %p42
      %p44 = scmp.ne.s32.totalorder %s36, %s39
      %p45 = scmp.eq.s32.totalorder %s12, 0
      %p46 = por %p44, %p45
      %p47 = scmp.ne.s32.totalorder %s36, %s39
      %p48 = scmp.eq.s32.totalorder %s17, 1
      %p49 = por %p47, %p48
      %p50 = scmp.ne.s32.totalorder %s39, %s40
      %p51 = scmp.eq.s32.totalorder %s17, 0
      %p52 = por %p50, %p51
      %p53 = scmp.ne.s32.totalorder %s39, %s40
      %p54 = scmp.eq.s32.totalorder %s18, 1
      %p55 = por %p53, %p54
      %p57 = scmp.ne.s32.totalorder %s40, %s56
      %p58 = scmp.eq.s32.totalorder %s18, 0
      %p59 = por %p57, %p58
      %s61 = sadd.s32 %s60, 1
      %p64 = scmp.eq.s32.totalorder %s12, 1
      %p65 = scmp.ne.s32.totalorder %s60, %s62
      %p66 = scmp.eq.s32.totalorder %s12, 0
      %p67 = por %p65, %p66
      %p68 = scmp.ne.s32.totalorder %s60, %s62
      %p69 = scmp.eq.s32.totalorder %s17, 1
      %p70 = por %p68, %p69
      %p71 = scmp.ne.s32.totalorder %s62, %s63
      %p72 = scmp.eq.s32.totalorder %s17, 0
      %p73 = por %p71, %p72
      %p74 = scmp.ne.s32.totalorder %s62, %s63
      %p75 = scmp.eq.s32.totalorder %s18, 1
      %p76 = por %p74, %p75
      %p78 = scmp.ne.s32.totalorder %s63, %s77
      %p79 = scmp.eq.s32.totalorder %s18, 0
      %p80 = por %p78, %p79
      %s82 = sadd.s32 %s81, 1
      %p85 = scmp.eq.s32.totalorder %s12, 1
      %p86 = scmp.ne.s32.totalorder %s81, %s83
      %p87 = scmp.eq.s32.totalorder %s12, 0
      %p88 = por %p86, %p87
      %p89 = scmp.ne.s32.totalorder %s81, %s83
      %p90 = scmp.eq.s32.totalorder %s17, 1
      %p91 = por %p89, %p90
      %p92 = scmp.ne.s32.totalorder %s83, %s84
      %p93 = scmp.eq.s32.totalorder %s17, 0
      %p94 = por %p92, %p93
      %p95 = scmp.ne.s32.totalorder %s83, %s84
      %p96 = scmp.eq.s32.totalorder %s18, 1
      %p97 = por %p95, %p96
      %p99 = scmp.ne.s32.totalorder %s84, %s98
      %p100 = scmp.eq.s32.totalorder %s18, 0
      %p101 = por %p99, %p100
      %s102 = ssub.s32 %s19, %s31
      %s103 = ssub.s32 %s20, %s27
      %s104 = sor.u32 %s102, %s103
      %p105 = scmp.eq.s32.totalorder %s104, 0
      %s107 = sadd.s32 %s106, 1
      %s108 = scalar_select %p105, %s106, %s107
      %p111 = pneg %p105
      %p112 = scmp.eq.s32.totalorder %s12, 1
      %p113 = por %p111, %p112
      %p114 = scmp.ne.s32.totalorder %s106, %s109
      %p115 = scmp.eq.s32.totalorder %s12, 0
      %p116 = por %p114, %p115
      %p117 = scmp.ne.s32.totalorder %s106, %s109
      %p118 = scmp.eq.s32.totalorder %s17, 1
      %p119 = por %p117, %p118
      %p120 = scmp.ne.s32.totalorder %s109, %s110
      %p121 = scmp.eq.s32.totalorder %s17, 0
      %p122 = por %p120, %p121
      %p123 = scmp.ne.s32.totalorder %s109, %s110
      %p124 = scmp.eq.s32.totalorder %s18, 1
      %p125 = por %p123, %p124
      %p127 = scmp.ne.s32.totalorder %s110, %s126
      %p128 = scmp.eq.s32.totalorder %s18, 0
      %p129 = por %p127, %p128
      %p130 = scmp.le.s32.totalorder 1, %s12
      %p131 = scmp.lt.s32.totalorder %s12, 3
      %p132 = pnand %p130, %p131
      %p133 = pneg %p132
      // Predicated region
      $region9: #{tpu_custom_call.1} parent=5 // pred_check
        _
      $region10: #{tpu_custom_call.1} parent=5 // pred_check_branch
        %135 = sbr.rel (%p132) target = $region12
      $region11: #{tpu_custom_call.1} parent=5 // pred_region
        %s136 = ssub.s32 %s12, 1
        // Predicated region
        $region13: #{tpu_custom_call.1} parent=11 // pred_check
          %p137 = pneg %p73
        $region14: #{tpu_custom_call.1} parent=11 // pred_check_branch
          %139 = sbr.rel (%p137) target = $region16
        $region15: #{tpu_custom_call.1} parent=11 // pred_region
          _
        $region16: #{tpu_custom_call.1} parent=11 // pred_fallthru
          _
        // Predicated region
        $region17: #{tpu_custom_call.1} parent=11 // pred_check
          %p140 = pneg %p94
        $region18: #{tpu_custom_call.1} parent=11 // pred_check_branch
          %142 = sbr.rel (%p140) target = $region20
        $region19: #{tpu_custom_call.1} parent=11 // pred_region
          _
        $region20: #{tpu_custom_call.1} parent=11 // pred_fallthru
          _
      $region12: #{tpu_custom_call.1} parent=5 // pred_fallthru
        _
      %p143 = scmp.lt.s32.totalorder %s12, 2
      // Predicated region
      $region21: #{tpu_custom_call.1} parent=5 // pred_check
        %p144 = pneg %p143
      $region22: #{tpu_custom_call.1} parent=5 // pred_check_branch
        %146 = sbr.rel (%p144) target = $region24
      $region23: #{tpu_custom_call.1} parent=5 // pred_region
        // Predicated region
        $region25: #{tpu_custom_call.1} parent=23 // pred_check
          %p147 = pneg %p46
        $region26: #{tpu_custom_call.1} parent=23 // pred_check_branch
          %149 = sbr.rel (%p147) target = $region28
        $region27: #{tpu_custom_call.1} parent=23 // pred_region
          %s150 = smul.u32 2, %s20
          %p151 = scmp.lt.s32.totalorder %s19, 1
          %s152 = scalar_select %p151, %s19, 1
          %p153 = scmp.lt.s32.totalorder %s150, 1
          %s154 = scalar_select %p153, %s150, 1
          %s155 = smul.addr %s152, 10
          %s156 = sadd.s32 %s154, %s155
          %s157 = smul.addr %s156, 8
          %s158 = scalar_lea.vmem %s0, %s157
          %s159 = smul.u32 2, %s20
        $region28: #{tpu_custom_call.1} parent=23 // pred_fallthru
          _
      $region24: #{tpu_custom_call.1} parent=5 // pred_fallthru
        _
      %p160 = scmp.le.s32.totalorder 1, %s12
      %p161 = scmp.lt.s32.totalorder %s12, 3
      %p162 = pnand %p160, %p161
      %p163 = pneg %p162
      // Predicated region
      $region29: #{tpu_custom_call.1} parent=5 // pred_check
        _
      $region30: #{tpu_custom_call.1} parent=5 // pred_check_branch
        %165 = sbr.rel (%p162) target = $region32
      $region31: #{tpu_custom_call.1} parent=5 // pred_region
        %s166 = ssub.s32 %s12, 1
        %s167 = smul.u32 2, %s22
        %p168 = scmp.lt.s32.totalorder %s21, 1
        %s169 = scalar_select %p168, %s21, 1
        %p170 = scmp.lt.s32.totalorder %s167, 1
        %s171 = scalar_select %p170, %s167, 1
        %s172 = smul.addr %s169, 10
        %s173 = sadd.s32 %s171, %s172
        %s174 = smul.addr %s173, 8
        %s175 = scalar_lea.vmem %s0, %s174
        %p176 = pneg %p52
        %p177 = pneg %p49
        %p178 = pneg %p73
        %p179 = pneg %p70
        %p180 = pneg %p94
        %p181 = pneg %p91
        %p182 = pneg %p122
        %p183 = pneg %p119
        %s184 = sand.u32 %s109, 1
        %s185 = scalar_lea.sflag [#allocation3], %s184
        %s186 = sand.u32 %s109, 1
        %s187 = smul.addr %s186, 16
        %s188 = scalar_lea.vmem [#allocation2], %s187
        %s189 = smul.u32 2, %s22
        %p190 = scmp.lt.s32.totalorder %s21, 1
        %s191 = scalar_select %p190, %s21, 1
        %p192 = scmp.lt.s32.totalorder %s189, 1
        %s193 = scalar_select %p192, %s189, 1
        %s194 = smul.addr %s191, 10
        %s195 = sadd.s32 %s193, %s194
        %s196 = smul.addr %s195, 8
        %s197 = scalar_lea.vmem %s0, %s196
        %s198 = smul.u32 2, %s22
        %s199 = smul.u32 2, %s22
        %v200 = vld [vmem:[%s1] sm:$0xff]
        %v201 = vld [vmem:[%s197] sm:$0xff]
        %v202 = vld [vmem:[%s197 + $0x8] sm:$0xff]
        %v203 = vld [vmem:[%s197 + $0x10] sm:$0xff]
        %v204 = vld [vmem:[%s197 + $0x18] sm:$0xff]
        %v205 = vld [vmem:[%s197 + $0x20] sm:$0xff]
        %v206 = vld [vmem:[%s197 + $0x28] sm:$0xff]
        %v207 = vld [vmem:[%s197 + $0x30] sm:$0xff]
        %v208 = vld [vmem:[%s197 + $0x38] sm:$0xff]
        %v209 = vld [vmem:[%s197 + $0x40] sm:$0xf]
        %v210 = vld [vmem:[%s197 + $0x48] sm:$0xf]
        %v211 = vld [vmem:[%s2] sm:$0xff]
        %213 = vset.pattern.permute.xlu0 0
        %214 = vperm.xlu0 %213, %v211
        %v215 = vpop.permute.xlu0 %214
        %vm217 = vcmask 293888
        %v219 = vsel %vm217, %v200, 0
        %vm221 = vcmask 1043456
        %v223 = vsel %vm221, %v209, 0
        %v226 = vsel %vm221, %v210, 0
        %228 = vmatprep.subr.mxu0 0.0
        %229 = vmatpush1.msra.mxu0 0.0
        %230 = vmatprep.subr.mxu0 0.0
        %231 = vmatpush1.msra.mxu0 0.0
        %232 = vmatprep.subr.mxu0 0.0
        %233 = vmatpush1.msra.mxu0 0.0
        %234 = vmatprep.subr.mxu0 0.0
        %235 = vmatpush1.msra.mxu0 0.0
        %236 = vmatprep.subr.mxu0 0.0
        %237 = vmatpush1.msra.mxu0 0.0
        %238 = vmatprep.subr.mxu0 0.0
        %239 = vmatpush1.msra.mxu0 0.0
        %240 = vmatprep.subr.mxu0 0.0
        %241 = vmatpush1.msra.mxu0 0.0
        %242 = vmatprep.subr.mxu0 0.0
        %243 = vmatpush1.msra.mxu0 0.0
        %244 = vmatprep.subr.mxu0 0.0
        %245 = vmatpush1.msra.mxu0 0.0
        %246 = vmatprep.subr.mxu0 0.0
        %247 = vmatpush1.msra.mxu0 0.0
        %248 = vmatprep.subr.mxu0 0.0
        %249 = vmatpush1.msra.mxu0 0.0
        %250 = vmatprep.subr.mxu0 %v226
        %251 = vmatpush1.msra.mxu0 %v223
        %252 = vmatprep.subr.mxu0 %v208
        %253 = vmatpush1.msra.mxu0 %v207
        %254 = vmatprep.subr.mxu0 %v206
        %255 = vmatpush1.msra.mxu0 %v205
        %256 = vmatprep.subr.mxu0 %v204
        %257 = vmatpush1.msra.mxu0 %v203
        %258 = vmatprep.subr.mxu0 %v202
        %259 = vmatpush1.msra.mxu0 %v201
        %260 = vmatprep.subr.mxu0 0.0
        %261 = vmatpush2.msra.mxu0 0.0
        %262 = vmatprep.subr.mxu0 0.0
        %263 = vmatpush2.msra.mxu0 0.0
        %264 = vmatprep.subr.mxu0 0.0
        %265 = vmatpush2.msra.mxu0 0.0
        %266 = vmatprep.subr.mxu0 0.0
        %267 = vmatpush2.msra.mxu0 0.0
        %268 = vmatprep.subr.mxu0 0.0
        %269 = vmatpush2.msra.mxu0 0.0
        %270 = vmatprep.subr.mxu0 0.0
        %271 = vmatpush2.msra.mxu0 0.0
        %272 = vmatprep.subr.mxu0 0.0
        %273 = vmatpush2.msra.mxu0 0.0
        %274 = vmatprep.subr.mxu0 0.0
        %275 = vmatpush2.msra.mxu0 0.0
        %276 = vmatprep.subr.mxu0 0.0
        %277 = vmatpush2.msra.mxu0 0.0
        %278 = vmatprep.subr.mxu0 0.0
        %279 = vmatpush2.msra.mxu0 0.0
        %280 = vmatprep.subr.mxu0 0.0
        %281 = vmatpush2.msra.mxu0 0.0
        %282 = vmatprep.subr.mxu0 0.0
        %283 = vmatpush2.msra.mxu0 0.0
        %284 = vmatprep.subr.mxu0 0.0
        %285 = vmatpush2.msra.mxu0 0.0
        %286 = vmatprep.subr.mxu0 0.0
        %287 = vmatpush2.msra.mxu0 0.0
        %288 = vmatprep.subr.mxu0 0.0
        %289 = vmatpush2.msra.mxu0 0.0
        %290 = vmatprep.subr.mxu0 0.0
        %291 = vmatpush2.msra.mxu0 0.0
        %292 = vmatprep.mubr.f32.mxu0 0.0
        %293 = vmatmul.mubr.f32.gmra.mxu0 %v219
        %v294 = vpop.f32.mrf.mxu0
        %v295 = vadd.f32 %v215, %v294
        %v296 = vpop.f32.mrf.mxu0
        %v297 = vadd.f32 %v215, %v296
        %298 = vdwg.mxu0
        %299 = vst [vmem:[%s188] sm:$0xff] %v295
        %300 = vst [vmem:[%s188 + $0x8] sm:$0xff] %v297
        %s301 = sand.u32 %s109, 1
        %s302 = scalar_lea.sflag [#allocation3], %s301
        %s303 = sand.u32 %s109, 1
        %s304 = smul.addr %s303, 16
        %s305 = scalar_lea.vmem [#allocation2], %s304
        // Predicated region
        $region33: #{tpu_custom_call.1} parent=31 // pred_check
          %p306 = pneg %p119
        $region34: #{tpu_custom_call.1} parent=31 // pred_check_branch
          %308 = sbr.rel (%p306) target = $region36
        $region35: #{tpu_custom_call.1} parent=31 // pred_region
          %s309 = smul.u32 2, %s22
          %s311 = ssub.s32 256, 256
          %312 = vsyncadd %s302, %s311
          %s313 = smul.addr %s21, 2
          %s314 = sadd.s32 %s309, %s313
          %s315 = smul.addr %s314, 128
          %s316 = scalar_lea.hbm %s3, %s315
          %s318 = sshll.u32 %s305, 4
          %s319 = int_to_ptr.vmem [resolvable:$true] %s318
          %321 = dma.vmem_to_hbm [thread:$0]  %s319, 256, %s316, %s302
        $region36: #{tpu_custom_call.1} parent=31 // pred_fallthru
          _
      $region32: #{tpu_custom_call.1} parent=5 // pred_fallthru
        _
      %p322 = scmp.le.s32.totalorder 2, %s12
      // Predicated region
      $region37: #{tpu_custom_call.1} parent=5 // pred_check
        %p323 = pneg %p322
      $region38: #{tpu_custom_call.1} parent=5 // pred_check_branch
        %325 = sbr.rel (%p323) target = $region40
      $region39: #{tpu_custom_call.1} parent=5 // pred_region
        %s326 = ssub.s32 %s12, 2
        // Predicated region
        $region41: #{tpu_custom_call.1} parent=39 // pred_check
          %p327 = pneg %p125
        $region42: #{tpu_custom_call.1} parent=39 // pred_check_branch
          %329 = sbr.rel (%p327) target = $region44
        $region43: #{tpu_custom_call.1} parent=39 // pred_region
          %s330 = sand.u32 %s110, 1
          %s331 = scalar_lea.sflag [#allocation3], %s330
          %s332 = sand.u32 %s110, 1
          %s333 = smul.addr %s332, 16
          %s334 = scalar_lea.vmem [#allocation2], %s333
          %335 = dma.done %s331, 256
        $region44: #{tpu_custom_call.1} parent=39 // pred_fallthru
          _
      $region40: #{tpu_custom_call.1} parent=5 // pred_fallthru
        _
    $region6: #{tpu_custom_call.1} parent=1 // loop_footer
      %s16 = sadd.s32 1, %s12
    $region7: #{tpu_custom_call.1} parent=1 // loop_footer_branch
      %11 = sbr.rel target = $region3
    $region8: #{tpu_custom_call.1} parent=1 // loop_exit
      _
    %336 = vsyncpa [#allocation3], 1
    %s337 = scalar_lea.sflag [#allocation3], 1
    %338 = vsyncpa %s337, 1

</llo_original>
